<compile_context>
chip_gen: v7x
topology: tpu7x:2x2x1
jax: 0.10.0
libtpu: 0.0.40
codegen_flags: <defaults>
</compile_context>

<pallas_src>
import functools

import jax
import jax.numpy as jnp
import numpy as np
from jax.experimental import pallas as pl
from jax.experimental.pallas import tpu as pltpu


def _round_up(x, m):
    return ((x + m - 1) // m) * m


def _cdiv(a, b):
    return (a + b - 1) // b


def _vmem_capacity_bytes():
    try:
        return int(pltpu.get_tpu_info().vmem_capacity_bytes)
    except Exception:  # unknown runtime: assume the smallest (v7x-like) VMEM
        return 64 * 1024 * 1024


def _pick_tile_s(per_lane_bytes, s, budget_bytes, n_buffers):
    """Largest 128-lane-multiple spatial tile whose n_buffers copies fit the budget."""
    if s <= 128:
        return s                      # single block equal to the full (small) dim
    budget_lanes = max(128, (budget_bytes // (n_buffers * per_lane_bytes)) // 128 * 128)
    full_lanes = (s // 128) * 128     # largest 128-multiple that stays in-bounds
    return min(budget_lanes, full_lanes)


def _pool_sum_kernel(x_ref, o_ref, *, s_total, tile_s, tiles_per_split, needs_mask):
    """Accumulate per-channel spatial sums of one (split, batch) row into o_ref."""
    p = pl.program_id(0)
    j = pl.program_id(2)

    # Fresh (split, batch) output block: zero the resident f32 accumulator.
    @pl.when(j == 0)
    def _():
        o_ref[...] = jnp.zeros_like(o_ref)

    x = x_ref[...].astype(jnp.float32)            # (tile_n, C, tile_s)

    def accumulate(vals):
        # Lane reduce per tile; fully hidden under the HBM stream.
        o_ref[...] += jnp.sum(vals, axis=-1)[None, :, None, :]

    if needs_mask:
        # Unclamped global element offset of this step's tile.
        start = (p * tiles_per_split + j) * tile_s
        is_boundary = start + tile_s > s_total

        @pl.when(jnp.logical_not(is_boundary))
        def _():
            accumulate(x)

        @pl.when(is_boundary)
        def _():
            # Pallas does NOT zero out-of-bounds lanes of a partial block (and
            # fully out-of-range steps re-read the last tile): mask them away.
            lane = jax.lax.broadcasted_iota(jnp.int32, x.shape, dimension=2)
            accumulate(jnp.where(start + lane < s_total, x, 0.0))
    else:
        accumulate(x)


def _gate_mlp_kernel(psum_ref, w1t_ref, b1_ref, w2t_ref, b2_ref, o_ref, *, inv_s):
    """Combine split partial sums, apply 1/S, fc1 -> relu -> fc2 -> sigmoid."""
    pooled = jnp.sum(psum_ref[...], axis=0) * inv_s                      # (N, C)
    h = jnp.dot(pooled, w1t_ref[...], preferred_element_type=jnp.float32) + b1_ref[...]
    h = jnp.maximum(h, 0.0)                                              # (N, H)
    y = jnp.dot(h, w2t_ref[...], preferred_element_type=jnp.float32) + b2_ref[...]
    o_ref[...] = jax.nn.sigmoid(y).astype(o_ref.dtype)                   # (N, C)


def global_perceptron(x, w1, b1, w2, b2, *, vmem_budget_bytes=None):
    """x: (N, C, D, H, W); weights as in nn.Conv3d (1x1x1 kernel dims squeezed).
    Returns the sigmoid gate of shape (N, C, 1, 1, 1) in x.dtype (f32 if x is
    not floating point)."""
    n, c, d, h, w = x.shape
    hidden = w1.shape[0]
    assert w1.shape == (hidden, c) and w2.shape == (c, hidden)
    assert b1.shape == (hidden,) and b2.shape == (c,)

    s = d * h * w
    itemsize = jnp.dtype(x.dtype).itemsize
    out_dtype = x.dtype if jnp.issubdtype(x.dtype, jnp.floating) else jnp.float32

    vmem_cap = _vmem_capacity_bytes()
    if vmem_budget_bytes is None:
        # Streamed-input budget: conservative on 64 MiB parts (v7x), generous on
        # 128 MiB parts (v5e/v6e) so large volumes fit in one or few tiles.
        vmem_budget_bytes = (24 * 1024 * 1024 if vmem_cap <= 80 * 1024 * 1024
                             else 56 * 1024 * 1024)

    tile_n = 1  # TODO(synk): raise for very large N / small S (fewer grid steps).
    # VMEM sublane padding granularity for the streamed dtype (8/16/32 for 4/2/1 B).
    c_pad = _round_up(c, 8 * max(1, 4 // itemsize))
    per_lane = tile_n * c_pad * itemsize

    # v7x megacore: with batch 1 only one 'parallel' batch block exists, so split
    # the spatial sweep in two and let each TensorCore own half of it.
    n_splits = 2 if n == 1 else 1

    buffers = 2
    tile_s = _pick_tile_s(per_lane, s, vmem_budget_bytes, buffers)
    if n_splits > 1 and s > 128:
        tile_s = min(tile_s, max(128, _round_up(_cdiv(s, n_splits), 128)))
    n_tiles = _cdiv(s, tile_s)
    if n_tiles < n_splits:
        n_splits = 1
    if n_tiles > 2 * n_splits:
        # Multi-tile sweep per core: small blocks expose per-DMA latency, so use
        # a 3-deep input pipeline (slightly smaller tiles, same VMEM budget).
        buffers = 3
        t3 = _pick_tile_s(per_lane, s, vmem_budget_bytes, buffers)
        if n_splits > 1 and s > 128:
            t3 = min(t3, max(128, _round_up(_cdiv(s, n_splits), 128)))
        if t3 < tile_s:
            tile_s = t3
            n_tiles = _cdiv(s, tile_s)
    tiles_per_split = _cdiv(n_tiles, n_splits)
    needs_mask = (s % tile_s != 0) or (tiles_per_split * n_splits != n_tiles)

    x_flat = x.reshape(n, c, s)  # free view: no pad, no extra HBM copy

    def x_index_map(p, i, j):
        # Clamp so trailing (fully out-of-range) steps of the last split re-read
        # the final valid tile; their contribution is masked to zero in-kernel.
        t = jnp.minimum(p * tiles_per_split + j, n_tiles - 1)
        return (i, 0, t)

    x_spec = pl.BlockSpec((tile_n, c, tile_s), x_index_map)
    if buffers == 3:
        try:
            x_spec = pl.BlockSpec((tile_n, c, tile_s), x_index_map,
                                  pipeline_mode=pl.Buffered(3))
        except (TypeError, AttributeError):
            pass  # older JAX: fall back to the default double buffering

    block_bytes = tile_n * c_pad * tile_s * itemsize
    vmem_limit = int(min(vmem_cap, buffers * block_bytes + 8 * 1024 * 1024))

    pool_kernel = functools.partial(
        _pool_sum_kernel, s_total=s, tile_s=tile_s,
        tiles_per_split=tiles_per_split, needs_mask=needs_mask)

    cost = pl.CostEstimate(
        flops=int(n * c * s),
        transcendentals=0,
        bytes_accessed=int(n * c * s * itemsize + n_splits * n * c * 4),
    )

    psum = pl.pallas_call(
        pool_kernel,
        out_shape=jax.ShapeDtypeStruct((n_splits, n, 1, c), jnp.float32),
        grid_spec=pltpu.PrefetchScalarGridSpec(
            num_scalar_prefetch=0,
            grid=(n_splits, n // tile_n, tiles_per_split),
            in_specs=[x_spec],
            out_specs=pl.BlockSpec((1, tile_n, 1, c), lambda p, i, j: (p, i, 0, 0)),
        ),
        compiler_params=pltpu.CompilerParams(
            dimension_semantics=("parallel", "parallel", "arbitrary"),
            vmem_limit_bytes=vmem_limit,
        ),
        cost_estimate=cost,
    )(x_flat)

    # Tiny epilogue kernel: pre-transpose weights once in the wrapper (no
    # in-kernel transposes), combine splits, normalise by the true S, MLP + gate.
    w1t = jnp.asarray(w1, jnp.float32).T                 # (C, hidden)
    w2t = jnp.asarray(w2, jnp.float32).T                 # (hidden, C)
    b1_2d = jnp.asarray(b1, jnp.float32).reshape(1, hidden)
    b2_2d = jnp.asarray(b2, jnp.float32).reshape(1, c)

    gate = pl.pallas_call(
        functools.partial(_gate_mlp_kernel, inv_s=1.0 / float(s)),
        out_shape=jax.ShapeDtypeStruct((n, c), out_dtype),
    )(psum.reshape(n_splits, n, c), w1t, b1_2d, w2t, b2_2d)

    return gate.reshape(n, c, 1, 1, 1)


def _reference(x, w1, b1, w2, b2):
    pooled = jnp.mean(x.astype(jnp.float32), axis=(2, 3, 4))             # (N, C)
    h = jnp.maximum(pooled @ jnp.asarray(w1, jnp.float32).T + b1[None, :], 0.0)
    y = jax.nn.sigmoid(h @ jnp.asarray(w2, jnp.float32).T + b2[None, :])
    return y.reshape(x.shape[0], x.shape[1], 1, 1, 1)


def _check(x, w1, b1, w2, b2, rtol=1e-5, atol=1e-5, **kw):
    out = jax.block_until_ready(global_perceptron(x, w1, b1, w2, b2, **kw))
    ref = _reference(x, w1, b1, w2, b2)
    assert out.shape == (x.shape[0], x.shape[1], 1, 1, 1)
    np.testing.assert_allclose(np.asarray(jnp.asarray(out, jnp.float32)),
                               np.asarray(jnp.asarray(ref, jnp.float32)),
                               rtol=rtol, atol=atol)


if __name__ == "__main__":
    N, C, HIDDEN = 2, 4, 8
    key = jax.random.PRNGKey(0)
    kx, k1, k2, k3, k4, kx2, kx3, kx4, kx5 = jax.random.split(key, 9)

    # Conv3d 1x1x1 weights with the kernel dims squeezed out.
    w1 = 0.1 * jax.random.normal(k1, (HIDDEN, C), dtype=jnp.float32)   # fc1.weight
    b1 = 0.1 * jax.random.normal(k2, (HIDDEN,), dtype=jnp.float32)     # fc1.bias
    w2 = 0.1 * jax.random.normal(k3, (C, HIDDEN), dtype=jnp.float32)   # fc2.weight
    b2 = 0.1 * jax.random.normal(k4, (C,), dtype=jnp.float32)          # fc2.bias

    # 1) 128-aligned spatial extent: single full tile, no masking.
    x1 = jax.random.normal(kx, (N, C, 8, 8, 8), dtype=jnp.float32)
    _check(x1, w1, b1, w2, b2)

    # 2) Non-128-multiple spatial extent: partial boundary block, no HBM pad copy.
    x2 = jax.random.normal(kx2, (N, C, 10, 10, 10), dtype=jnp.float32)
    _check(x2, w1, b1, w2, b2)

    # 3) Tiny VMEM budget: multi-tile spatial sweep with the 3-deep input pipeline.
    x3 = jax.random.normal(kx3, (N, C, 16, 16, 16), dtype=jnp.float32)
    _check(x3, w1, b1, w2, b2, vmem_budget_bytes=64 * 1024)

    # 4) Batch 1: spatial sweep split over two 'parallel' blocks (v7x both cores).
    x4 = jax.random.normal(kx4, (1, C, 12, 12, 12), dtype=jnp.float32)
    _check(x4, w1, b1, w2, b2)

    # 5) bf16 streaming (half the HBM bytes); accumulation stays in f32.
    x5 = jax.random.normal(kx5, (N, C, 16, 16, 16), dtype=jnp.bfloat16)
    _check(x5, w1, b1, w2, b2, rtol=2e-2, atol=2e-2)

    print("KERNEL_OK")
</pallas_src>

<mosaic_0001>
module attributes {stable_mosaic.version = 11 : i64} {
  func.func @_pool_sum_kernel(%arg0: i32, %arg1: i32, %arg2: i32, %arg3: memref<1x4x512xf32, #tpu.memory_space<vmem>>, %arg4: memref<1x1x1x4xf32, #tpu.memory_space<vmem>>) attributes {dimension_semantics = [#tpu.dimension_semantics<parallel>, #tpu.dimension_semantics<parallel>, #tpu.dimension_semantics<arbitrary>], iteration_bounds = array<i64: 1, 2, 1>, scalar_prefetch = 0 : i64, scratch_operands = 0 : i64, tpu.core_type = #tpu.core_type<tc>, window_params = [{transform_indices = @transform_0, window_bounds = array<i64: 1, 4, 512>}, {transform_indices = @transform_1, window_bounds = array<i64: 1, 1, 1, 4>}]} {
    %c0_i32 = arith.constant 0 : i32
    %0 = arith.cmpi eq, %arg2, %c0_i32 : i32
    %1 = arith.extui %0 : i1 to i32
    %c0_i32_0 = arith.constant 0 : i32
    %2 = arith.cmpi ne, %1, %c0_i32_0 : i32
    scf.if %2 {
      %cst_11 = arith.constant 0.000000e+00 : f32
      %9 = vector.broadcast %cst_11 : f32 to vector<1x1x1x4xf32>
      %c0_12 = arith.constant 0 : index
      %c0_13 = arith.constant 0 : index
      %c0_14 = arith.constant 0 : index
      %c0_15 = arith.constant 0 : index
      %10 = vector.load %arg4[%c0_12, %c0_13, %c0_14, %c0_15] : memref<1x1x1x4xf32, #tpu.memory_space<vmem>>, vector<1x1x1x4xf32>
      tpu.vector_store %arg4[%c0_12, %c0_13, %c0_14, %c0_15], %9 {strides = array<i32>} : memref<1x1x1x4xf32, #tpu.memory_space<vmem>>, vector<1x1x1x4xf32>,
    } else {
    }
    %c0 = arith.constant 0 : index
    %c0_1 = arith.constant 0 : index
    %c0_2 = arith.constant 0 : index
    %3 = vector.load %arg3[%c0, %c0_1, %c0_2] : memref<1x4x512xf32, #tpu.memory_space<vmem>>, vector<1x4x512xf32>
    %c0_3 = arith.constant 0 : index
    %c0_4 = arith.constant 0 : index
    %c0_5 = arith.constant 0 : index
    %c0_6 = arith.constant 0 : index
    %4 = vector.load %arg4[%c0_3, %c0_4, %c0_5, %c0_6] : memref<1x1x1x4xf32, #tpu.memory_space<vmem>>, vector<1x1x1x4xf32>
    %cst = arith.constant dense<0.000000e+00> : vector<1x4xf32>
    %5 = vector.multi_reduction <add>, %3, %cst [2] : vector<1x4x512xf32> to vector<1x4xf32>
    %6 = vector.shape_cast %5 : vector<1x4xf32> to vector<1x1x1x4xf32>
    %7 = arith.addf %4, %6 : vector<1x1x1x4xf32>
    %c0_7 = arith.constant 0 : index
    %c0_8 = arith.constant 0 : index
    %c0_9 = arith.constant 0 : index
    %c0_10 = arith.constant 0 : index
    %8 = vector.load %arg4[%c0_7, %c0_8, %c0_9, %c0_10] : memref<1x1x1x4xf32, #tpu.memory_space<vmem>>, vector<1x1x1x4xf32>
    tpu.vector_store %arg4[%c0_7, %c0_8, %c0_9, %c0_10], %7 {strides = array<i32>} : memref<1x1x1x4xf32, #tpu.memory_space<vmem>>, vector<1x1x1x4xf32>,
    return
  }
  func.func @transform_0(%arg0: i32, %arg1: i32, %arg2: i32) -> (i32, i32, i32) {
    %c1_i32 = arith.constant 1 : i32
    %0 = arith.muli %arg0, %c1_i32 : i32
    %1 = arith.addi %0, %arg2 : i32
    %c0_i32 = arith.constant 0 : i32
    %2 = arith.minsi %1, %c0_i32 : i32
    %c0_i32_0 = arith.constant 0 : i32
    %c0_i32_1 = arith.constant 0 : i32
    return %arg1, %c0_i32_0, %2 : i32, i32, i32
  }
  func.func @transform_1(%arg0: i32, %arg1: i32, %arg2: i32) -> (i32, i32, i32, i32) {
    %c0_i32 = arith.constant 0 : i32
    %c0_i32_0 = arith.constant 0 : i32
    %c0_i32_1 = arith.constant 0 : i32
    return %arg0, %arg1, %c0_i32, %c0_i32_0 : i32, i32, i32, i32
  }
}

</mosaic_0001>

<llo_original>
// kernel: tpu_custom_call.1
$region0: #{tpu_custom_call.1}
  #allocation0 [shape = 'u32[]', space=smem, size = 0x4, offset = 0x4, fixed_abs, tag = 'smem constant byte address 0x4 - core index']
  #allocation1 [shape = 'u32[144,128]{1,0:T(1,128)}', space=vmem, size = 0x12000, scoped, tag = 'internal scratch']
  %s0 = inlined_call_operand.hbm [shape: f32[2,4,512], index: 0, kind: input, shape index: {}]
  %s1 = inlined_call_operand.hbm [shape: f32[1,2,1,4], index: 1, kind: output, shape index: {}]
  %s2 = sld [smem:[#allocation0]]
  $region45: #{tpu_custom_call.1} parent=0
    _
  %s4 = ssub.s32 1, %s2
  %s5 = scalar_select 0, %s4, %s2
  $region1: #{tpu_custom_call.1} parent=0
    #allocation2 [shape = 'u8[16384]{0}', space=vmem, size = 0x4000, scoped, tag = 'input window, operand 0']
    #allocation3 [shape = 's32[2]{0}', space=sflag, size = 0x8, scoped, tag = 'scoped memory for tpu_custom_call.1']
    #allocation4 [shape = 's32[2]{0}', space=sflag, size = 0x8, scoped, tag = 'scoped memory for tpu_custom_call.1']
    #allocation5 [shape = 'u8[1024]{0}', space=vmem, size = 0x400, scoped, tag = 'output window, operand 0']
    %6 = vsyncpa [#allocation3], 0
    %s7 = scalar_lea.sflag [#allocation3], 1
    %8 = vsyncpa %s7, 0
    %9 = vsyncpa [#allocation4], 0
    %s10 = scalar_lea.sflag [#allocation4], 1
    %11 = vsyncpa %s10, 0
    loop: start=0, step=1, limit=4
    $region2: #{tpu_custom_call.1} parent=1 // loop_pre_header
      _
    $region3: #{tpu_custom_call.1} parent=1 // loop_header
      %s13 = sphi 0, %s17
      %p14 = scmp.ge.s32.totalorder %s13, 4
      %s20 = sphi 0, %s39
      %s21 = sphi 0, %s35
      %s22 = sphi 0, %s31
      %s23 = sphi 0, %s20
      %s24 = sphi 0, %s21
      %s25 = sphi 0, %s22
      %s26 = sphi 0, %s23
      %s27 = sphi 0, %s24
      %s28 = sphi 0, %s25
      %s50 = sphi 0, %s52
      %s53 = sphi 0, %s50
      %s54 = sphi 0, %s53
      %s70 = sphi 0, %s54
      %s78 = sphi 0, %s80
      %s81 = sphi 0, %s78
      %s82 = sphi 0, %s81
      %s98 = sphi 0, %s82
    $region4: #{tpu_custom_call.1} parent=1 // loop_header_branch
      %16 = sbr.rel (%p14) target = $region8
    $region5: #{tpu_custom_call.1} parent=1 // loop_body
      %s18 = ssub.s32 %s13, 1
      %s19 = ssub.s32 %s13, 2
      %s29 = sadd.s32 1, %s22
      %p30 = scmp.ge.s32.totalorder %s29, 1
      %s31 = scalar_select %p30, 0, %s29
      %s32 = sadd.s32 1, %s21
      %s33 = scalar_select %p30, %s32, %s21
      %p34 = scmp.ge.s32.totalorder %s33, 2
      %s35 = scalar_select %p34, 0, %s33
      %s36 = sadd.s32 1, %s20
      %s37 = scalar_select %p34, %s36, %s20
      %p38 = scmp.ge.s32.totalorder %s37, 1
      %s39 = scalar_select %p38, 0, %s37
      %s40 = sadd.s32 %s20, %s22
      %p41 = scmp.lt.s32.totalorder %s40, 0
      %s42 = scalar_select %p41, %s40, 0
      %s43 = sadd.s32 %s39, %s31
      %p44 = scmp.lt.s32.totalorder %s43, 0
      %s45 = scalar_select %p44, %s43, 0
      %s46 = ssub.s32 %s21, %s35
      %s47 = ssub.s32 %s42, %s45
      %s48 = sor.u32 %s46, %s47
      %p49 = scmp.eq.s32.totalorder %s48, 0
      %s51 = sadd.s32 %s50, 1
      %s52 = scalar_select %p49, %s50, %s51
      %p55 = pneg %p49
      %p56 = scmp.eq.s32.totalorder %s13, 1
      %p57 = por %p55, %p56
      %p58 = scmp.ne.s32.totalorder %s50, %s53
      %p59 = scmp.eq.s32.totalorder %s13, 0
      %p60 = por %p58, %p59
      %p61 = scmp.ne.s32.totalorder %s50, %s53
      %p62 = scmp.eq.s32.totalorder %s18, 1
      %p63 = por %p61, %p62
      %p64 = scmp.ne.s32.totalorder %s53, %s54
      %p65 = scmp.eq.s32.totalorder %s18, 0
      %p66 = por %p64, %p65
      %p67 = scmp.ne.s32.totalorder %s53, %s54
      %p68 = scmp.eq.s32.totalorder %s19, 1
      %p69 = por %p67, %p68
      %p71 = scmp.ne.s32.totalorder %s54, %s70
      %p72 = scmp.eq.s32.totalorder %s19, 0
      %p73 = por %p71, %p72
      %s74 = ssub.s32 %s20, %s39
      %s75 = ssub.s32 %s21, %s35
      %s76 = sor.u32 %s74, %s75
      %p77 = scmp.eq.s32.totalorder %s76, 0
      %s79 = sadd.s32 %s78, 1
      %s80 = scalar_select %p77, %s78, %s79
      %p83 = pneg %p77
      %p84 = scmp.eq.s32.totalorder %s13, 1
      %p85 = por %p83, %p84
      %p86 = scmp.ne.s32.totalorder %s78, %s81
      %p87 = scmp.eq.s32.totalorder %s13, 0
      %p88 = por %p86, %p87
      %p89 = scmp.ne.s32.totalorder %s78, %s81
      %p90 = scmp.eq.s32.totalorder %s18, 1
      %p91 = por %p89, %p90
      %p92 = scmp.ne.s32.totalorder %s81, %s82
      %p93 = scmp.eq.s32.totalorder %s18, 0
      %p94 = por %p92, %p93
      %p95 = scmp.ne.s32.totalorder %s81, %s82
      %p96 = scmp.eq.s32.totalorder %s19, 1
      %p97 = por %p95, %p96
      %p99 = scmp.ne.s32.totalorder %s82, %s98
      %p100 = scmp.eq.s32.totalorder %s19, 0
      %p101 = por %p99, %p100
      %p102 = scmp.le.s32.totalorder 1, %s13
      %p103 = scmp.lt.s32.totalorder %s13, 3
      %p104 = pnand %p102, %p103
      %p105 = pneg %p104
      // Predicated region
      $region9: #{tpu_custom_call.1} parent=5 // pred_check
        _
      $region10: #{tpu_custom_call.1} parent=5 // pred_check_branch
        %107 = sbr.rel (%p104) target = $region12
      $region11: #{tpu_custom_call.1} parent=5 // pred_region
        %s108 = ssub.s32 %s13, 1
      $region12: #{tpu_custom_call.1} parent=5 // pred_fallthru
        _
      %p109 = scmp.lt.s32.totalorder %s13, 2
      // Predicated region
      $region13: #{tpu_custom_call.1} parent=5 // pred_check
        %p110 = pneg %p109
      $region14: #{tpu_custom_call.1} parent=5 // pred_check_branch
        %112 = sbr.rel (%p110) target = $region16
      $region15: #{tpu_custom_call.1} parent=5 // pred_region
        // Predicated region
        $region17: #{tpu_custom_call.1} parent=15 // pred_check
          %p113 = pneg %p60
        $region18: #{tpu_custom_call.1} parent=15 // pred_check_branch
          %115 = sbr.rel (%p113) target = $region20
        $region19: #{tpu_custom_call.1} parent=15 // pred_region
          %s116 = sand.u32 %s50, 1
          %s117 = scalar_lea.sflag [#allocation3], %s116
          %s118 = sand.u32 %s50, 1
          %s119 = smul.addr %s118, 16
          %s120 = scalar_lea.vmem [#allocation2], %s119
          %s121 = sadd.s32 %s20, %s22
          %p122 = scmp.lt.s32.totalorder %s121, 0
          %s123 = scalar_select %p122, %s121, 0
          %s124 = smul.u32 4, %s123
          %s126 = ssub.s32 256, 256
          %127 = vsyncadd %s117, %s126
          %s128 = smul.addr %s21, 4
          %s129 = sadd.s32 %s124, %s128
          %s130 = smul.addr %s129, 64
          %s131 = scalar_lea.hbm %s0, %s130
          %s133 = sshll.u32 %s120, 4
          %s134 = int_to_ptr.vmem [resolvable:$true] %s133
          %136 = dma.hbm_to_vmem [thread:$0]  %s131, 256, %s134, %s117
        $region20: #{tpu_custom_call.1} parent=15 // pred_fallthru
          _
      $region16: #{tpu_custom_call.1} parent=5 // pred_fallthru
        _
      %p137 = scmp.le.s32.totalorder 1, %s13
      %p138 = scmp.lt.s32.totalorder %s13, 3
      %p139 = pnand %p137, %p138
      %p140 = pneg %p139
      // Predicated region
      $region21: #{tpu_custom_call.1} parent=5 // pred_check
        _
      $region22: #{tpu_custom_call.1} parent=5 // pred_check_branch
        %142 = sbr.rel (%p139) target = $region24
      $region23: #{tpu_custom_call.1} parent=5 // pred_region
        %s143 = ssub.s32 %s13, 1
        %s144 = sand.u32 %s53, 1
        %s145 = scalar_lea.sflag [#allocation3], %s144
        %s146 = sand.u32 %s53, 1
        %s147 = smul.addr %s146, 16
        %s148 = scalar_lea.vmem [#allocation2], %s147
        // Predicated region
        $region25: #{tpu_custom_call.1} parent=23 // pred_check
          %p149 = pneg %p66
        $region26: #{tpu_custom_call.1} parent=23 // pred_check_branch
          %151 = sbr.rel (%p149) target = $region28
        $region27: #{tpu_custom_call.1} parent=23 // pred_region
          %152 = dma.done %s145, 256
        $region28: #{tpu_custom_call.1} parent=23 // pred_fallthru
          _
        %s153 = sand.u32 %s53, 1
        %s154 = scalar_lea.sflag [#allocation3], %s153
        %s155 = sand.u32 %s53, 1
        %s156 = smul.addr %s155, 16
        %s157 = scalar_lea.vmem [#allocation2], %s156
        %p158 = pneg %p66
        %p159 = pneg %p63
        %p160 = pneg %p94
        %p161 = pneg %p91
        %s162 = sand.u32 %s81, 1
        %s163 = scalar_lea.sflag [#allocation4], %s162
        %s164 = sand.u32 %s81, 1
        %s165 = scalar_lea.vmem [#allocation5], %s164
        %s166 = sadd.s32 %s23, %s25
        %p167 = scmp.lt.s32.totalorder %s166, 0
        %s168 = scalar_select %p167, %s166, 0
        %s169 = smul.u32 4, %s168
        %p170 = scmp.eq.s32.totalorder %s25, 0
        // Predicated region
        $region29: #{tpu_custom_call.1} parent=23 // pred_check
          %p171 = pneg %p170
        $region30: #{tpu_custom_call.1} parent=23 // pred_check_branch
          %173 = sbr.rel (%p171) target = $region32
        $region31: #{tpu_custom_call.1} parent=23 // pred_region
          %vm174 = vcmask 24576
          %175 = vst.msk [vmem:[%s165] sm:$0x1] %vm174, 0.0
        $region32: #{tpu_custom_call.1} parent=23 // pred_fallthru
          _
        %v176 = vld [vmem:[%s148] sm:$0xff]
        %v177 = vld [vmem:[%s148 + $0x8] sm:$0xff]
        %v178 = vld [vmem:[%s165] sm:$0x1]
        %v181 = vcombine.high %v176, %v176
        %v182 = vcombine.high %v177, %v177
        %vm185 = vcmask 1043456
        %v186 = vsel %vm185, %v176, 0.0
        %v187 = vsel %vm185, %v181, 0.0
        %v188 = vadd.f32 %v186, %v187
        %v189 = vsel %vm185, %v177, 0.0
        %v190 = vadd.f32 %v188, %v189
        %v191 = vsel %vm185, %v182, 0.0
        %v192 = vadd.f32 %v190, %v191
        %193 = vadd.xlane.f32.xlu0 %v192
        %v194 = vpop.xlane.xlu0 %193
        %v196 = vlaneseq
        %v197 = vshrl.u32 %v196, 7
        %v198 = vsub.s32 0, %v197
        %v199 = vrot.slane %v194, %v198
        %v200 = vlaneseq
        %v201 = vshrl.u32 %v200, 7
        %v202 = vsub.s32 1, %v201
        %v203 = vrot.slane %v194, %v202
        %v204 = vlaneseq
        %v205 = vshrl.u32 %v204, 7
        %v206 = vsub.s32 2, %v205
        %v207 = vrot.slane %v194, %v206
        %v208 = vlaneseq
        %v209 = vshrl.u32 %v208, 7
        %v210 = vsub.s32 3, %v209
        %v211 = vrot.slane %v194, %v210
        %v212 = vcombine.low %v199, %v203
        %v213 = vcombine.low %v207, %v211
        %v215 = vunpack.c.l.s4 1966171168
        %v216 = vunpack.c.0.s8 %v215
        %v217 = vlaneseq
        %v218 = vshrl.u32 %v217, 7
        %v219 = vsub.s32 %v216, %v218
        %v220 = vrot.slane %v212, %v219
        %v222 = vunpack.c.l.s4 1966171168
        %v223 = vunpack.c.0.s8 %v222
        %v224 = vlaneseq
        %v225 = vshrl.u32 %v224, 7
        %v226 = vsub.s32 %v223, %v225
        %v227 = vrot.slane %v213, %v226
        %v228 = vcombine.low %v220, %v227
        %v230 = vunpack.c.l.s4 1966171168
        %v231 = vunpack.c.0.s8 %v230
        %v232 = vlaneseq
        %v233 = vshrl.u32 %v232, 7
        %v234 = vsub.s32 %v231, %v233
        %v235 = vrot.slane %v228, %v234
        %236 = vset.pattern.permute.xlu0 0
        %237 = vperm.xlu0 %236, %v235
        %v238 = vpop.permute.xlu0 %237
        %v239 = vlaneseq
        %v240 = vand.u32 %v239, 127
        %v241 = vlaneseq
        %v242 = vshrl.u32 %v241, 7
        %v243 = vsub.s32 %v240, %v242
        %v244 = vrot.slane %v238, %v243
        %v246 = vunpack.c.l.s4 1966171168
        %v247 = vunpack.c.0.s8 %v246
        %v248 = vlaneseq
        %v249 = vshrl.u32 %v248, 7
        %v250 = vsub.s32 %v247, %v249
        %v251 = vrot.slane %v244, %v250
        %v253 = vunpack.c.l.s4 1966171168
        %v254 = vunpack.c.0.s8 %v253
        %v255 = vlaneseq
        %v256 = vshrl.u32 %v255, 7
        %v257 = vsub.s32 %v254, %v256
        %v258 = vrot.slane %v251, %v257
        %v260 = vadd.f32 %v178, %v258
        %vm261 = vcmask 24576
        %262 = vst.msk [vmem:[%s165] sm:$0x1] %vm261, %v260
        %s263 = sand.u32 %s81, 1
        %s264 = scalar_lea.sflag [#allocation4], %s263
        %s265 = sand.u32 %s81, 1
        %s266 = scalar_lea.vmem [#allocation5], %s265
        // Predicated region
        $region33: #{tpu_custom_call.1} parent=23 // pred_check
          %p267 = pneg %p91
        $region34: #{tpu_custom_call.1} parent=23 // pred_check_branch
          %269 = sbr.rel (%p267) target = $region36
        $region35: #{tpu_custom_call.1} parent=23 // pred_region
          %s271 = ssub.s32 16, 16
          %272 = vsyncadd %s264, %s271
          %s273 = smul.addr %s23, 2
          %s274 = sadd.s32 %s24, %s273
          %s275 = smul.addr %s274, 16
          %s276 = scalar_lea.hbm %s1, %s275
          %s278 = sshll.u32 %s266, 4
          %s279 = int_to_ptr.vmem [resolvable:$true] %s278
          %281 = dma.vmem_to_hbm [thread:$0]  %s279, 16, %s276, %s264
        $region36: #{tpu_custom_call.1} parent=23 // pred_fallthru
          _
      $region24: #{tpu_custom_call.1} parent=5 // pred_fallthru
        _
      %p282 = scmp.le.s32.totalorder 2, %s13
      // Predicated region
      $region37: #{tpu_custom_call.1} parent=5 // pred_check
        %p283 = pneg %p282
      $region38: #{tpu_custom_call.1} parent=5 // pred_check_branch
        %285 = sbr.rel (%p283) target = $region40
      $region39: #{tpu_custom_call.1} parent=5 // pred_region
        %s286 = ssub.s32 %s13, 2
        // Predicated region
        $region41: #{tpu_custom_call.1} parent=39 // pred_check
          %p287 = pneg %p97
        $region42: #{tpu_custom_call.1} parent=39 // pred_check_branch
          %289 = sbr.rel (%p287) target = $region44
        $region43: #{tpu_custom_call.1} parent=39 // pred_region
          %s290 = sand.u32 %s82, 1
          %s291 = scalar_lea.sflag [#allocation4], %s290
          %s292 = sand.u32 %s82, 1
          %s293 = scalar_lea.vmem [#allocation5], %s292
          %294 = dma.done %s291, 16
        $region44: #{tpu_custom_call.1} parent=39 // pred_fallthru
          _
      $region40: #{tpu_custom_call.1} parent=5 // pred_fallthru
        _
    $region6: #{tpu_custom_call.1} parent=1 // loop_footer
      %s17 = sadd.s32 1, %s13
    $region7: #{tpu_custom_call.1} parent=1 // loop_footer_branch
      %12 = sbr.rel target = $region3
    $region8: #{tpu_custom_call.1} parent=1 // loop_exit
      _
    %295 = vsyncpa [#allocation3], 1
    %s296 = scalar_lea.sflag [#allocation3], 1
    %297 = vsyncpa %s296, 1
    %298 = vsyncpa [#allocation4], 1
    %s299 = scalar_lea.sflag [#allocation4], 1
    %300 = vsyncpa %s299, 1

</llo_original>
